<compile_context>
chip_gen: v7x
topology: tpu7x:2x2x1
jax: 0.10.0
libtpu: 0.0.40
codegen_flags: <defaults>
</compile_context>

<pallas_src>
import functools

import jax
import jax.numpy as jnp
from jax.experimental import pallas as pl
from jax.experimental.pallas import tpu as pltpu


def simple_nn_kernel(ids_ref, wf_ref, b1_ref, w2_ref, b2_ref, out_ref, *, vocab_pad):
    # ids_ref: [TB, S]      int32 token ids (VMEM)
    # wf_ref:  [V_pad, H]   bf16 fused weight = (emb_table @ w1) / S  (zero-padded rows)
    # b1_ref:  [1, H]       f32
    # w2_ref:  [H, O_pad]   bf16 (only column 0 is real)
    # b2_ref:  [1, 1]       f32 scalar in SMEM
    # out_ref: [TB, O_pad]  f32 (lane-dense; column 0 is the real output)
    ids = ids_ref[...]                                       # [TB, S] int32
    tb, seq = ids.shape

    # Fused embedding-gather + mean-pool + first Linear:
    #   counts[b, v] = #{s : ids[b, s] == v}        (VPU compares/adds, S unrolled, f32)
    #   hidden       = relu(counts @ W_fused + b1)  (MXU contraction over vocab lanes)
    # Out-of-range ids (>= V) match only zero-padded rows / nothing -> contribute zeros.
    lane_vocab = jax.lax.broadcasted_iota(jnp.int32, (tb, vocab_pad), 1)
    counts = jnp.zeros((tb, vocab_pad), jnp.float32)
    for s in range(seq):                                     # static unroll (S small)
        counts = counts + (lane_vocab == ids[:, s:s + 1]).astype(jnp.float32)

    hidden = jnp.dot(counts.astype(jnp.bfloat16), wf_ref[...],
                     preferred_element_type=jnp.float32) + b1_ref[...]
    hidden = jnp.maximum(hidden, 0.0)                        # ReLU  [TB, H] f32

    # 256 -> 1 projection against a lane-padded [H, 128] w2 so the store is a
    # full-width, unmasked vst; padded columns are sliced away in the wrapper.
    out = jnp.dot(hidden.astype(jnp.bfloat16), w2_ref[...],
                  preferred_element_type=jnp.float32) + b2_ref[0, 0]
    out_ref[...] = out.astype(out_ref.dtype)


def simple_nn_forward(token_ids, emb_table, w1, b1, w2, b2, *, batch_tile=512):
    """token_ids: [B, S] int32; returns [B, output_dim] f32."""
    B, S = token_ids.shape
    V, E = emb_table.shape
    H = w1.shape[1]
    O = w2.shape[1]
    assert O == 1, "SMEM-scalar bias path assumes output_dim == 1 (module spec)"

    LANE, SUB = 128, 8
    V_pad = pl.cdiv(V, LANE) * LANE          # 50 -> 128 (one-hot lane width / MXU K dim)
    O_pad = pl.cdiv(O, LANE) * LANE          # 1  -> 128 (lane-dense output)

    # Batch tile: multiple of 8, capped at batch_tile, and kept small enough that the
    # batch grid has >=2 steps when B allows it (so v7x's 2nd TensorCore gets work).
    TB = min(batch_tile, max(SUB, pl.cdiv(B, 2 * SUB) * SUB))
    B_pad = pl.cdiv(B, TB) * TB

    # Constant-fold embedding table, first Linear weight and the 1/S mean scale into a
    # single fused weight (both operands are static parameters -> pure precompute).
    inv_s = 1.0 / S
    w_fused = (emb_table.astype(jnp.float32) @ w1.astype(jnp.float32)) * inv_s   # [V, H]
    wf_p = (jnp.zeros((V_pad, H), jnp.float32).at[:V, :].set(w_fused)
            .astype(jnp.bfloat16))
    b1_p = b1.reshape(1, H).astype(jnp.float32)
    w2_p = (jnp.zeros((H, O_pad), jnp.float32).at[:, :O].set(w2)
            .astype(jnp.bfloat16))
    b2_s = b2.reshape(1, O).astype(jnp.float32)               # (1, 1) scalar -> SMEM
    ids_p = jnp.zeros((B_pad, S), jnp.int32).at[:B, :].set(token_ids)

    grid = (B_pad // TB,)
    kernel = functools.partial(simple_nn_kernel, vocab_pad=V_pad)

    out_p = pl.pallas_call(
        kernel,
        out_shape=jax.ShapeDtypeStruct((B_pad, O_pad), jnp.float32),
        grid=grid,
        in_specs=[
            pl.BlockSpec((TB, S), lambda i: (i, 0)),            # token ids (per tile)
            pl.BlockSpec((V_pad, H), lambda i: (0, 0)),         # fused emb@w1 weight
            pl.BlockSpec((1, H), lambda i: (0, 0)),             # b1
            pl.BlockSpec((H, O_pad), lambda i: (0, 0)),         # w2 (lane-padded)
            pl.BlockSpec(memory_space=pltpu.MemorySpace.SMEM),  # b2 scalar
        ],
        out_specs=pl.BlockSpec((TB, O_pad), lambda i: (i, 0)),
        compiler_params=pltpu.CompilerParams(
            dimension_semantics=("parallel",),                  # megacore / v7x 2-TC
        ),
    )(ids_p, wf_p, b1_p, w2_p, b2_s)

    # Drop batch padding and lane padding (only column 0 of the output is real).
    return out_p[:B, :O]


if __name__ == "__main__":
    # Module hyper-parameters (from code4_1.py)
    embedding_dim = 100
    hidden_dim = 256
    output_dim = 1
    input_dim = 50          # small synthetic vocabulary
    batch, seq = 2, 8       # small shapes for the token-id input

    key = jax.random.PRNGKey(0)
    k_emb, k_w1, k_b1, k_w2, k_b2, k_x = jax.random.split(key, 6)

    # Deterministic parameter init (shapes match the nn.Module).
    emb_table = jax.random.normal(k_emb, (input_dim, embedding_dim), jnp.float32)
    w1 = jax.random.normal(k_w1, (embedding_dim, hidden_dim), jnp.float32) * 0.1
    b1 = jax.random.normal(k_b1, (1, hidden_dim), jnp.float32) * 0.1
    w2 = jax.random.normal(k_w2, (hidden_dim, output_dim), jnp.float32) * 0.1
    b2 = jax.random.normal(k_b2, (1, output_dim), jnp.float32) * 0.1

    token_ids = jax.random.randint(k_x, (batch, seq), 0, input_dim, jnp.int32)

    out = simple_nn_forward(token_ids, emb_table, w1, b1, w2, b2)
    out = jax.block_until_ready(out)

    # Pure-JAX f32 reference for sanity (kernel uses bf16 MXU inputs -> loose tolerance).
    embedded_ref = jnp.take(emb_table, token_ids, axis=0)
    pooled_ref = jnp.mean(embedded_ref, axis=1)
    hidden_ref = jnp.maximum(pooled_ref @ w1 + b1, 0.0)
    out_ref = hidden_ref @ w2 + b2
    assert out.shape == (batch, output_dim)
    assert jnp.allclose(out, out_ref, atol=3e-2, rtol=3e-2)

    print("KERNEL_OK")
</pallas_src>

<mosaic_0001>
module attributes {stable_mosaic.version = 11 : i64} {
  func.func @simple_nn_kernel(%arg0: i32, %arg1: memref<8x8xi32, #tpu.memory_space<vmem>>, %arg2: memref<128x256xbf16, #tpu.memory_space<vmem>>, %arg3: memref<1x256xf32, #tpu.memory_space<vmem>>, %arg4: memref<256x128xbf16, #tpu.memory_space<vmem>>, %arg5: memref<1x1xf32, #tpu.memory_space<smem>>, %arg6: memref<8x128xf32, #tpu.memory_space<vmem>>) attributes {dimension_semantics = [#tpu.dimension_semantics<parallel>], iteration_bounds = array<i64: 1>, scalar_prefetch = 0 : i64, scratch_operands = 0 : i64, tpu.core_type = #tpu.core_type<tc>, window_params = [{transform_indices = @transform_0, window_bounds = array<i64: 8, 8>}, {pipeline_mode = #tpu.pipeline_mode<synchronous>, transform_indices = @transform_1, window_bounds = array<i64: 128, 256>}, {pipeline_mode = #tpu.pipeline_mode<synchronous>, transform_indices = @transform_2, window_bounds = array<i64: 1, 256>}, {pipeline_mode = #tpu.pipeline_mode<synchronous>, transform_indices = @transform_3, window_bounds = array<i64: 256, 128>}, {transform_indices = @transform_4, window_bounds = array<i64: 1, 1>}, {transform_indices = @transform_5, window_bounds = array<i64: 8, 128>}]} {
    %c0 = arith.constant 0 : index
    %c0_0 = arith.constant 0 : index
    %0 = vector.load %arg1[%c0, %c0_0] : memref<8x8xi32, #tpu.memory_space<vmem>>, vector<8x8xi32>
    %1 = tpu.iota {dimensions = array<i32: 1>} : vector<8x128xi32>
    %cst = arith.constant 0.000000e+00 : f32
    %2 = vector.broadcast %cst : f32 to vector<8x128xf32>
    %3 = vector.extract_strided_slice %0 {offsets = [0, 0], sizes = [8, 1], strides = [1, 1]} : vector<8x8xi32> to vector<8x1xi32>
    %4 = vector.broadcast %3 : vector<8x1xi32> to vector<8x128xi32>
    %5 = arith.cmpi eq, %1, %4 : vector<8x128xi32>
    %6 = arith.extui %5 : vector<8x128xi1> to vector<8x128xi32>
    %7 = arith.sitofp %6 : vector<8x128xi32> to vector<8x128xf32>
    %8 = arith.addf %2, %7 : vector<8x128xf32>
    %9 = vector.extract_strided_slice %0 {offsets = [0, 1], sizes = [8, 1], strides = [1, 1]} : vector<8x8xi32> to vector<8x1xi32>
    %10 = vector.broadcast %9 : vector<8x1xi32> to vector<8x128xi32>
    %11 = arith.cmpi eq, %1, %10 : vector<8x128xi32>
    %12 = arith.extui %11 : vector<8x128xi1> to vector<8x128xi32>
    %13 = arith.sitofp %12 : vector<8x128xi32> to vector<8x128xf32>
    %14 = arith.addf %8, %13 : vector<8x128xf32>
    %15 = vector.extract_strided_slice %0 {offsets = [0, 2], sizes = [8, 1], strides = [1, 1]} : vector<8x8xi32> to vector<8x1xi32>
    %16 = vector.broadcast %15 : vector<8x1xi32> to vector<8x128xi32>
    %17 = arith.cmpi eq, %1, %16 : vector<8x128xi32>
    %18 = arith.extui %17 : vector<8x128xi1> to vector<8x128xi32>
    %19 = arith.sitofp %18 : vector<8x128xi32> to vector<8x128xf32>
    %20 = arith.addf %14, %19 : vector<8x128xf32>
    %21 = vector.extract_strided_slice %0 {offsets = [0, 3], sizes = [8, 1], strides = [1, 1]} : vector<8x8xi32> to vector<8x1xi32>
    %22 = vector.broadcast %21 : vector<8x1xi32> to vector<8x128xi32>
    %23 = arith.cmpi eq, %1, %22 : vector<8x128xi32>
    %24 = arith.extui %23 : vector<8x128xi1> to vector<8x128xi32>
    %25 = arith.sitofp %24 : vector<8x128xi32> to vector<8x128xf32>
    %26 = arith.addf %20, %25 : vector<8x128xf32>
    %27 = vector.extract_strided_slice %0 {offsets = [0, 4], sizes = [8, 1], strides = [1, 1]} : vector<8x8xi32> to vector<8x1xi32>
    %28 = vector.broadcast %27 : vector<8x1xi32> to vector<8x128xi32>
    %29 = arith.cmpi eq, %1, %28 : vector<8x128xi32>
    %30 = arith.extui %29 : vector<8x128xi1> to vector<8x128xi32>
    %31 = arith.sitofp %30 : vector<8x128xi32> to vector<8x128xf32>
    %32 = arith.addf %26, %31 : vector<8x128xf32>
    %33 = vector.extract_strided_slice %0 {offsets = [0, 5], sizes = [8, 1], strides = [1, 1]} : vector<8x8xi32> to vector<8x1xi32>
    %34 = vector.broadcast %33 : vector<8x1xi32> to vector<8x128xi32>
    %35 = arith.cmpi eq, %1, %34 : vector<8x128xi32>
    %36 = arith.extui %35 : vector<8x128xi1> to vector<8x128xi32>
    %37 = arith.sitofp %36 : vector<8x128xi32> to vector<8x128xf32>
    %38 = arith.addf %32, %37 : vector<8x128xf32>
    %39 = vector.extract_strided_slice %0 {offsets = [0, 6], sizes = [8, 1], strides = [1, 1]} : vector<8x8xi32> to vector<8x1xi32>
    %40 = vector.broadcast %39 : vector<8x1xi32> to vector<8x128xi32>
    %41 = arith.cmpi eq, %1, %40 : vector<8x128xi32>
    %42 = arith.extui %41 : vector<8x128xi1> to vector<8x128xi32>
    %43 = arith.sitofp %42 : vector<8x128xi32> to vector<8x128xf32>
    %44 = arith.addf %38, %43 : vector<8x128xf32>
    %45 = vector.extract_strided_slice %0 {offsets = [0, 7], sizes = [8, 1], strides = [1, 1]} : vector<8x8xi32> to vector<8x1xi32>
    %46 = vector.broadcast %45 : vector<8x1xi32> to vector<8x128xi32>
    %47 = arith.cmpi eq, %1, %46 : vector<8x128xi32>
    %48 = arith.extui %47 : vector<8x128xi1> to vector<8x128xi32>
    %49 = arith.sitofp %48 : vector<8x128xi32> to vector<8x128xf32>
    %50 = arith.addf %44, %49 : vector<8x128xf32>
    %51 = arith.truncf %50 : vector<8x128xf32> to vector<8x128xbf16>
    %c0_1 = arith.constant 0 : index
    %c0_2 = arith.constant 0 : index
    %52 = vector.load %arg2[%c0_1, %c0_2] : memref<128x256xbf16, #tpu.memory_space<vmem>>, vector<128x256xbf16>
    %cst_3 = arith.constant dense<0.000000e+00> : vector<8x256xf32>
    %53 = tpu.matmul %51, %52, %cst_3 {dimension_numbers = #tpu.dot_dimension_numbers<[1], [0], [0], [1], [0, 0, 1, 1], [], []>} : vector<8x128xbf16>, vector<128x256xbf16>, vector<8x256xf32> -> vector<8x256xf32>
    %c0_4 = arith.constant 0 : index
    %c0_5 = arith.constant 0 : index
    %54 = vector.load %arg3[%c0_4, %c0_5] : memref<1x256xf32, #tpu.memory_space<vmem>>, vector<1x256xf32>
    %55 = vector.broadcast %54 : vector<1x256xf32> to vector<8x256xf32>
    %56 = arith.addf %53, %55 : vector<8x256xf32>
    %cst_6 = arith.constant 0.000000e+00 : f32
    %57 = vector.broadcast %cst_6 : f32 to vector<8x256xf32>
    %58 = arith.maximumf %56, %57 : vector<8x256xf32>
    %59 = arith.truncf %58 : vector<8x256xf32> to vector<8x256xbf16>
    %c0_7 = arith.constant 0 : index
    %c0_8 = arith.constant 0 : index
    %60 = vector.load %arg4[%c0_7, %c0_8] : memref<256x128xbf16, #tpu.memory_space<vmem>>, vector<256x128xbf16>
    %cst_9 = arith.constant dense<0.000000e+00> : vector<8x128xf32>
    %61 = tpu.matmul %59, %60, %cst_9 {dimension_numbers = #tpu.dot_dimension_numbers<[1], [0], [0], [1], [0, 0, 1, 1], [], []>} : vector<8x256xbf16>, vector<256x128xbf16>, vector<8x128xf32> -> vector<8x128xf32>
    %c0_10 = arith.constant 0 : index
    %c0_11 = arith.constant 0 : index
    %62 = memref.load %arg5[%c0_10, %c0_11] : memref<1x1xf32, #tpu.memory_space<smem>>
    %63 = vector.broadcast %62 : f32 to vector<8x128xf32>
    %64 = arith.addf %61, %63 : vector<8x128xf32>
    %c0_12 = arith.constant 0 : index
    %c0_13 = arith.constant 0 : index
    %65 = vector.load %arg6[%c0_12, %c0_13] : memref<8x128xf32, #tpu.memory_space<vmem>>, vector<8x128xf32>
    tpu.vector_store %arg6[%c0_12, %c0_13], %64 {strides = array<i32>} : memref<8x128xf32, #tpu.memory_space<vmem>>, vector<8x128xf32>,
    return
  }
  func.func @transform_0(%arg0: i32) -> (i32, i32) {
    %c0_i32 = arith.constant 0 : i32
    %c0_i32_0 = arith.constant 0 : i32
    return %arg0, %c0_i32 : i32, i32
  }
  func.func @transform_1(%arg0: i32) -> (i32, i32) {
    %c0_i32 = arith.constant 0 : i32
    %c0_i32_0 = arith.constant 0 : i32
    %c0_i32_1 = arith.constant 0 : i32
    return %c0_i32, %c0_i32_0 : i32, i32
  }
  func.func @transform_2(%arg0: i32) -> (i32, i32) {
    %c0_i32 = arith.constant 0 : i32
    %c0_i32_0 = arith.constant 0 : i32
    %c0_i32_1 = arith.constant 0 : i32
    return %c0_i32, %c0_i32_0 : i32, i32
  }
  func.func @transform_3(%arg0: i32) -> (i32, i32) {
    %c0_i32 = arith.constant 0 : i32
    %c0_i32_0 = arith.constant 0 : i32
    %c0_i32_1 = arith.constant 0 : i32
    return %c0_i32, %c0_i32_0 : i32, i32
  }
  func.func @transform_4(%arg0: i32) -> (i32, i32) {
    %c0_i32 = arith.constant 0 : i32
    %c0_i32_0 = arith.constant 0 : i32
    %c0_i32_1 = arith.constant 0 : i32
    return %c0_i32, %c0_i32_0 : i32, i32
  }
  func.func @transform_5(%arg0: i32) -> (i32, i32) {
    %c0_i32 = arith.constant 0 : i32
    %c0_i32_0 = arith.constant 0 : i32
    return %arg0, %c0_i32 : i32, i32
  }
}

</mosaic_0001>

<llo_original>
// kernel: tpu_custom_call.1
$region0: #{tpu_custom_call.1}
  #allocation0 [shape = 'u32[]', space=smem, size = 0x4, offset = 0x4, fixed_abs, tag = 'smem constant byte address 0x4 - core index']
  #allocation1 [shape = 'u32[144,128]{1,0:T(1,128)}', space=vmem, size = 0x12000, scoped, tag = 'internal scratch']
  #allocation2 [shape = 'f32[1,1]{1,0:T(1,128)S(6)}', space=smem, size = 0x200, scoped, tag = 'scoped memory for tpu_custom_call.1']
  %s0 = inlined_call_operand.hbm [shape: s32[8,8], index: 0, kind: input, shape index: {}]
  %s1 = inlined_call_operand.hbm [shape: bf16[128,256], index: 1, kind: input, shape index: {}]
  %s2 = inlined_call_operand.vmem [shape: f32[1,256], index: 2, kind: input, shape index: {}]
  %s3 = inlined_call_operand.hbm [shape: bf16[256,128], index: 3, kind: input, shape index: {}]
  %s4 = inlined_call_operand.<no memory space> [shape: f32[1,1], index: 4, kind: input, shape index: {}]
  %s5 = inlined_call_operand.hbm [shape: f32[8,128], index: 5, kind: output, shape index: {}]
  %s6 = sld [smem:[#allocation0]]
  $region42: #{tpu_custom_call.1} parent=0
    _
  %s8 = ssub.s32 1, %s6
  %s9 = scalar_select 0, %s8, %s6
  %10 = sst [smem:[#allocation2]] %s4
  $region1: #{tpu_custom_call.1} parent=0
    #allocation3 [shape = 'u8[4096]{0}', space=vmem, size = 0x1000, scoped, tag = 'input window, operand 0, single buffered']
    #allocation4 [shape = 's32[1]{0}', space=sflag, size = 0x4, scoped, tag = 'scoped memory for tpu_custom_call.1']
    #allocation5 [shape = 's32[1]{0}', space=sflag, size = 0x4, scoped, tag = 'scoped memory for tpu_custom_call.1']
    #allocation6 [shape = 'u8[65536]{0}', space=vmem, size = 0x10000, scoped, tag = 'input window, operand 1, single buffered']
    #allocation7 [shape = 's32[1]{0}', space=sflag, size = 0x4, scoped, tag = 'scoped memory for tpu_custom_call.1']
    #allocation8 [shape = 'u8[65536]{0}', space=vmem, size = 0x10000, scoped, tag = 'input window, operand 3, single buffered']
    #allocation9 [shape = 'u8[4096]{0}', space=vmem, size = 0x1000, scoped, tag = 'output window, operand 0, single buffered']
    %11 = vsyncpa [#allocation4], 0
    %12 = vsyncpa [#allocation7], 0
    %13 = vsyncpa [#allocation5], 0
    // Predicated region
    $region2: #{tpu_custom_call.1} parent=1 // pred_check
      _
    $region3: #{tpu_custom_call.1} parent=1 // pred_check_branch
      %15 = sbr.rel (0) target = $region5
    $region4: #{tpu_custom_call.1} parent=1 // pred_region
      %s17 = ssub.s32 128, 128
      %18 = vsyncadd [#allocation4], %s17
      %s20 = sshll.u32 [#allocation3], 4
      %s21 = int_to_ptr.vmem [resolvable:$true] %s20
      %23 = dma.hbm_to_vmem [thread:$0]  %s0, 128, %s21, [#allocation4]
    $region5: #{tpu_custom_call.1} parent=1 // pred_fallthru
      _
    // Predicated region
    $region6: #{tpu_custom_call.1} parent=1 // pred_check
      _
    $region7: #{tpu_custom_call.1} parent=1 // pred_check_branch
      %25 = sbr.rel (0) target = $region9
    $region8: #{tpu_custom_call.1} parent=1 // pred_region
      %s27 = ssub.s32 2048, 2048
      %28 = vsyncadd [#allocation7], %s27
      %s29 = sshll.u32 [#allocation6], 4
      %s30 = int_to_ptr.vmem [resolvable:$true] %s29
      %35 = dma.hbm_to_vmem [thread:$0]  %s1, 2048, %s30, [#allocation7], 128, 128, 8
    $region9: #{tpu_custom_call.1} parent=1 // pred_fallthru
      _
    // Predicated region
    $region10: #{tpu_custom_call.1} parent=1 // pred_check
      _
    $region11: #{tpu_custom_call.1} parent=1 // pred_check_branch
      %37 = sbr.rel (0) target = $region13
    $region12: #{tpu_custom_call.1} parent=1 // pred_region
      _
    $region13: #{tpu_custom_call.1} parent=1 // pred_fallthru
      _
    // Predicated region
    $region14: #{tpu_custom_call.1} parent=1 // pred_check
      _
    $region15: #{tpu_custom_call.1} parent=1 // pred_check_branch
      %39 = sbr.rel (0) target = $region17
    $region16: #{tpu_custom_call.1} parent=1 // pred_region
      %s41 = ssub.s32 2048, 2048
      %42 = vsyncadd [#allocation7], %s41
      %s43 = sshll.u32 [#allocation8], 4
      %s44 = int_to_ptr.vmem [resolvable:$true] %s43
      %49 = dma.hbm_to_vmem [thread:$0]  %s3, 2048, %s44, [#allocation7], 64, 64, 4
    $region17: #{tpu_custom_call.1} parent=1 // pred_fallthru
      _
    // Predicated region
    $region18: #{tpu_custom_call.1} parent=1 // pred_check
      _
    $region19: #{tpu_custom_call.1} parent=1 // pred_check_branch
      %51 = sbr.rel (0) target = $region21
    $region20: #{tpu_custom_call.1} parent=1 // pred_region
      _
    $region21: #{tpu_custom_call.1} parent=1 // pred_fallthru
      _
    // Predicated region
    $region22: #{tpu_custom_call.1} parent=1 // pred_check
      _
    $region23: #{tpu_custom_call.1} parent=1 // pred_check_branch
      %53 = sbr.rel (0) target = $region25
    $region24: #{tpu_custom_call.1} parent=1 // pred_region
      %54 = dma.done [#allocation4], 128
    $region25: #{tpu_custom_call.1} parent=1 // pred_fallthru
      _
    // Predicated region
    $region26: #{tpu_custom_call.1} parent=1 // pred_check
      _
    $region27: #{tpu_custom_call.1} parent=1 // pred_check_branch
      %56 = sbr.rel (0) target = $region29
    $region28: #{tpu_custom_call.1} parent=1 // pred_region
      %57 = dma.done [#allocation7], 2048
    $region29: #{tpu_custom_call.1} parent=1 // pred_fallthru
      _
    // Predicated region
    $region30: #{tpu_custom_call.1} parent=1 // pred_check
      _
    $region31: #{tpu_custom_call.1} parent=1 // pred_check_branch
      %59 = sbr.rel (0) target = $region33
    $region32: #{tpu_custom_call.1} parent=1 // pred_region
      %60 = dma.done [#allocation7], 2048
    $region33: #{tpu_custom_call.1} parent=1 // pred_fallthru
      _
    %v62 = vld [vmem:[#allocation3] sm:$0xff]
    %v63 = vlaneseq
    %v64 = vand.u32 %v63, 127
    %65 = vset.pattern.permute.xlu0 0
    %66 = vperm.xlu0 %65, %v62
    %v67 = vpop.permute.xlu0 %66
    %vm68 = vcmp.eq.s32.totalorder %v64, %v67
    %v69 = vsel %vm68, 1, 0
    %v70 = vcvt.s32.f32 %v69
    %v71 = vadd.f32 %v70, 0.0
    %72 = vset.pattern.permute.xlu0 1
    %73 = vperm.xlu0 %72, %v62
    %v74 = vpop.permute.xlu0 %73
    %vm75 = vcmp.eq.s32.totalorder %v64, %v74
    %v76 = vsel %vm75, 1, 0
    %v77 = vcvt.s32.f32 %v76
    %v78 = vadd.f32 %v71, %v77
    %79 = vset.pattern.permute.xlu0 2
    %80 = vperm.xlu0 %79, %v62
    %v81 = vpop.permute.xlu0 %80
    %vm82 = vcmp.eq.s32.totalorder %v64, %v81
    %v83 = vsel %vm82, 1, 0
    %v84 = vcvt.s32.f32 %v83
    %v85 = vadd.f32 %v78, %v84
    %86 = vset.pattern.permute.xlu0 3
    %87 = vperm.xlu0 %86, %v62
    %v88 = vpop.permute.xlu0 %87
    %vm89 = vcmp.eq.s32.totalorder %v64, %v88
    %v90 = vsel %vm89, 1, 0
    %v91 = vcvt.s32.f32 %v90
    %v92 = vadd.f32 %v85, %v91
    %93 = vset.pattern.permute.xlu0 4
    %94 = vperm.xlu0 %93, %v62
    %v95 = vpop.permute.xlu0 %94
    %vm96 = vcmp.eq.s32.totalorder %v64, %v95
    %v97 = vsel %vm96, 1, 0
    %v98 = vcvt.s32.f32 %v97
    %v99 = vadd.f32 %v92, %v98
    %100 = vset.pattern.permute.xlu0 5
    %101 = vperm.xlu0 %100, %v62
    %v102 = vpop.permute.xlu0 %101
    %vm103 = vcmp.eq.s32.totalorder %v64, %v102
    %v104 = vsel %vm103, 1, 0
    %v105 = vcvt.s32.f32 %v104
    %v106 = vadd.f32 %v99, %v105
    %107 = vset.pattern.permute.xlu0 6
    %108 = vperm.xlu0 %107, %v62
    %v109 = vpop.permute.xlu0 %108
    %vm110 = vcmp.eq.s32.totalorder %v64, %v109
    %v111 = vsel %vm110, 1, 0
    %v112 = vcvt.s32.f32 %v111
    %v113 = vadd.f32 %v106, %v112
    %114 = vset.pattern.permute.xlu0 7
    %115 = vperm.xlu0 %114, %v62
    %v116 = vpop.permute.xlu0 %115
    %vm117 = vcmp.eq.s32.totalorder %v64, %v116
    %v118 = vsel %vm117, 1, 0
    %v119 = vcvt.s32.f32 %v118
    %v120 = vadd.f32 %v113, %v119
    %v121 = vpack.c.bf16 %v120, %v120
    %v122 = vld [vmem:[#allocation6] sm:$0xff]
    %v123 = vld [vmem:[#allocation6 + $0x8] sm:$0xff]
    %v124 = vld [vmem:[#allocation6 + $0x10] sm:$0xff]
    %v125 = vld [vmem:[#allocation6 + $0x18] sm:$0xff]
    %v126 = vld [vmem:[#allocation6 + $0x20] sm:$0xff]
    %v127 = vld [vmem:[#allocation6 + $0x28] sm:$0xff]
    %v128 = vld [vmem:[#allocation6 + $0x30] sm:$0xff]
    %v129 = vld [vmem:[#allocation6 + $0x38] sm:$0xff]
    %v130 = vld [vmem:[#allocation6 + $0x40] sm:$0xff]
    %v131 = vld [vmem:[#allocation6 + $0x48] sm:$0xff]
    %v132 = vld [vmem:[#allocation6 + $0x50] sm:$0xff]
    %v133 = vld [vmem:[#allocation6 + $0x58] sm:$0xff]
    %v134 = vld [vmem:[#allocation6 + $0x60] sm:$0xff]
    %v135 = vld [vmem:[#allocation6 + $0x68] sm:$0xff]
    %v136 = vld [vmem:[#allocation6 + $0x70] sm:$0xff]
    %v137 = vld [vmem:[#allocation6 + $0x78] sm:$0xff]
    %v138 = vld [vmem:[%s2] sm:$0x3]
    %v140 = vlaneseq
    %v141 = vshrl.u32 %v140, 7
    %v142 = vsub.s32 0, %v141
    %v143 = vrot.slane %v138, %v142
    %v144 = vlaneseq
    %v145 = vshrl.u32 %v144, 7
    %v146 = vsub.s32 1, %v145
    %v147 = vrot.slane %v138, %v146
    %v166 = vunpack.c.l.b16 %v122
    %v167 = vunpack.c.h.b16 %v122
    %v168 = vunpack.c.l.b16 %v123
    %v169 = vunpack.c.h.b16 %v123
    %v170 = vunpack.c.l.b16 %v124
    %v171 = vunpack.c.h.b16 %v124
    %v172 = vunpack.c.l.b16 %v125
    %v173 = vunpack.c.h.b16 %v125
    %v174 = vunpack.c.l.b16 %v126
    %v175 = vunpack.c.h.b16 %v126
    %v176 = vunpack.c.l.b16 %v127
    %v177 = vunpack.c.h.b16 %v127
    %v178 = vunpack.c.l.b16 %v128
    %v179 = vunpack.c.h.b16 %v128
    %v180 = vunpack.c.l.b16 %v129
    %v181 = vunpack.c.h.b16 %v129
    %v182 = vunpack.c.l.b16 %v130
    %v183 = vunpack.c.h.b16 %v130
    %v184 = vunpack.c.l.b16 %v131
    %v185 = vunpack.c.h.b16 %v131
    %v186 = vunpack.c.l.b16 %v132
    %v187 = vunpack.c.h.b16 %v132
    %v188 = vunpack.c.l.b16 %v133
    %v189 = vunpack.c.h.b16 %v133
    %v190 = vunpack.c.l.b16 %v134
    %v191 = vunpack.c.h.b16 %v134
    %v192 = vunpack.c.l.b16 %v135
    %v193 = vunpack.c.h.b16 %v135
    %v194 = vunpack.c.l.b16 %v136
    %v195 = vunpack.c.h.b16 %v136
    %v196 = vunpack.c.l.b16 %v137
    %v197 = vunpack.c.h.b16 %v137
    %v198 = vpack.c.b16 %v168, %v166
    %v199 = vpack.c.b16 %v169, %v167
    %v200 = vpack.c.b16 %v172, %v170
    %v201 = vpack.c.b16 %v173, %v171
    %v202 = vpack.c.b16 %v176, %v174
    %v203 = vpack.c.b16 %v177, %v175
    %v204 = vpack.c.b16 %v180, %v178
    %v205 = vpack.c.b16 %v181, %v179
    %v206 = vpack.c.b16 %v184, %v182
    %v207 = vpack.c.b16 %v185, %v183
    %v208 = vpack.c.b16 %v188, %v186
    %v209 = vpack.c.b16 %v189, %v187
    %v210 = vpack.c.b16 %v192, %v190
    %v211 = vpack.c.b16 %v193, %v191
    %v212 = vpack.c.b16 %v196, %v194
    %v213 = vpack.c.b16 %v197, %v195
    %230 = vmatprep.subr.bf16.mxu0 %v199
    %231 = vmatpush1.bf16.msra.mxu0 %v198
    %232 = vmatprep.subr.bf16.mxu0 %v201
    %233 = vmatpush1.bf16.msra.mxu0 %v200
    %234 = vmatprep.subr.bf16.mxu0 %v203
    %235 = vmatpush1.bf16.msra.mxu0 %v202
    %236 = vmatprep.subr.bf16.mxu0 %v205
    %237 = vmatpush1.bf16.msra.mxu0 %v204
    %238 = vmatprep.subr.bf16.mxu0 %v207
    %239 = vmatpush1.bf16.msra.mxu0 %v206
    %240 = vmatprep.subr.bf16.mxu0 %v209
    %241 = vmatpush1.bf16.msra.mxu0 %v208
    %242 = vmatprep.subr.bf16.mxu0 %v211
    %243 = vmatpush1.bf16.msra.mxu0 %v210
    %244 = vmatprep.subr.bf16.mxu0 %v213
    %245 = vmatpush1.bf16.msra.mxu0 %v212
    %246 = vmatprep.subr.bf16.mxu0 0
    %247 = vmatpush1.bf16.msra.mxu0 0
    %248 = vmatprep.subr.bf16.mxu0 0
    %249 = vmatpush1.bf16.msra.mxu0 0
    %250 = vmatprep.subr.bf16.mxu0 0
    %251 = vmatpush1.bf16.msra.mxu0 0
    %252 = vmatprep.subr.bf16.mxu0 0
    %253 = vmatpush1.bf16.msra.mxu0 0
    %254 = vmatprep.subr.bf16.mxu0 0
    %255 = vmatpush1.bf16.msra.mxu0 0
    %256 = vmatprep.subr.bf16.mxu0 0
    %257 = vmatpush1.bf16.msra.mxu0 0
    %258 = vmatprep.subr.bf16.mxu0 0
    %259 = vmatpush1.bf16.msra.mxu0 0
    %260 = vmatprep.subr.bf16.mxu0 0
    %261 = vmatpush1.bf16.msra.mxu0 0
    %262 = vmatprep.mubr.bf16.mxu0 0
    %263 = vmatmul.mubr.bf16.gmra.mrb[0].mxu0 %v121
    %v264 = vpop.f32.mrb[0].mxu0
    %v265 = vadd.f32 %v143, %v264
    %v266 = vpop.f32.mrb[0].mxu0
    %v267 = vadd.f32 %v147, %v266
    %v268 = vpop.f32.mrb[0].mxu0
    %v269 = vpop.f32.mrb[0].mxu0
    %270 = vdwg.mxu0
    %v271 = vmax.f32 %v265, 0.0
    %v272 = vmax.f32 %v267, 0.0
    %v273 = vpack.c.bf16 %v271, %v271
    %v274 = vpack.c.bf16 %v272, %v272
    %v275 = vld [vmem:[#allocation8] sm:$0xf]
    %v276 = vld [vmem:[#allocation8 + $0x4] sm:$0xf]
    %v277 = vld [vmem:[#allocation8 + $0x8] sm:$0xf]
    %v278 = vld [vmem:[#allocation8 + $0xc] sm:$0xf]
    %v279 = vld [vmem:[#allocation8 + $0x10] sm:$0xf]
    %v280 = vld [vmem:[#allocation8 + $0x14] sm:$0xf]
    %v281 = vld [vmem:[#allocation8 + $0x18] sm:$0xf]
    %v282 = vld [vmem:[#allocation8 + $0x1c] sm:$0xf]
    %v283 = vld [vmem:[#allocation8 + $0x20] sm:$0xf]
    %v284 = vld [vmem:[#allocation8 + $0x24] sm:$0xf]
    %v285 = vld [vmem:[#allocation8 + $0x28] sm:$0xf]
    %v286 = vld [vmem:[#allocation8 + $0x2c] sm:$0xf]
    %v287 = vld [vmem:[#allocation8 + $0x30] sm:$0xf]
    %v288 = vld [vmem:[#allocation8 + $0x34] sm:$0xf]
    %v289 = vld [vmem:[#allocation8 + $0x38] sm:$0xf]
    %v290 = vld [vmem:[#allocation8 + $0x3c] sm:$0xf]
    %v291 = vld [vmem:[#allocation8 + $0x40] sm:$0xf]
    %v292 = vld [vmem:[#allocation8 + $0x44] sm:$0xf]
    %v293 = vld [vmem:[#allocation8 + $0x48] sm:$0xf]
    %v294 = vld [vmem:[#allocation8 + $0x4c] sm:$0xf]
    %v295 = vld [vmem:[#allocation8 + $0x50] sm:$0xf]
    %v296 = vld [vmem:[#allocation8 + $0x54] sm:$0xf]
    %v297 = vld [vmem:[#allocation8 + $0x58] sm:$0xf]
    %v298 = vld [vmem:[#allocation8 + $0x5c] sm:$0xf]
    %v299 = vld [vmem:[#allocation8 + $0x60] sm:$0xf]
    %v300 = vld [vmem:[#allocation8 + $0x64] sm:$0xf]
    %v301 = vld [vmem:[#allocation8 + $0x68] sm:$0xf]
    %v302 = vld [vmem:[#allocation8 + $0x6c] sm:$0xf]
    %v303 = vld [vmem:[#allocation8 + $0x70] sm:$0xf]
    %v304 = vld [vmem:[#allocation8 + $0x74] sm:$0xf]
    %v305 = vld [vmem:[#allocation8 + $0x78] sm:$0xf]
    %v306 = vld [vmem:[#allocation8 + $0x7c] sm:$0xf]
    %s307 = sld [smem:[#allocation2]]
    %v308 = vstv %s307
    %v341 = vunpack.c.l.b16 %v275
    %v342 = vunpack.c.l.b16 %v276
    %v343 = vunpack.c.l.b16 %v277
    %v344 = vunpack.c.l.b16 %v278
    %v345 = vunpack.c.l.b16 %v279
    %v346 = vunpack.c.l.b16 %v280
    %v347 = vunpack.c.l.b16 %v281
    %v348 = vunpack.c.l.b16 %v282
    %v349 = vunpack.c.l.b16 %v283
    %v350 = vunpack.c.l.b16 %v284
    %v351 = vunpack.c.l.b16 %v285
    %v352 = vunpack.c.l.b16 %v286
    %v353 = vunpack.c.l.b16 %v287
    %v354 = vunpack.c.l.b16 %v288
    %v355 = vunpack.c.l.b16 %v289
    %v356 = vunpack.c.l.b16 %v290
    %v357 = vunpack.c.l.b16 %v291
    %v358 = vunpack.c.l.b16 %v292
    %v359 = vunpack.c.l.b16 %v293
    %v360 = vunpack.c.l.b16 %v294
    %v361 = vunpack.c.l.b16 %v295
    %v362 = vunpack.c.l.b16 %v296
    %v363 = vunpack.c.l.b16 %v297
    %v364 = vunpack.c.l.b16 %v298
    %v365 = vunpack.c.l.b16 %v299
    %v366 = vunpack.c.l.b16 %v300
    %v367 = vunpack.c.l.b16 %v301
    %v368 = vunpack.c.l.b16 %v302
    %v369 = vunpack.c.l.b16 %v303
    %v370 = vunpack.c.l.b16 %v304
    %v371 = vunpack.c.l.b16 %v305
    %v372 = vunpack.c.l.b16 %v306
    %v373 = vpack.c.b16 %v342, %v341
    %v374 = vpack.c.b16 %v344, %v343
    %v375 = vpack.c.b16 %v346, %v345
    %v376 = vpack.c.b16 %v348, %v347
    %v377 = vpack.c.b16 %v350, %v349
    %v378 = vpack.c.b16 %v352, %v351
    %v379 = vpack.c.b16 %v354, %v353
    %v380 = vpack.c.b16 %v356, %v355
    %v381 = vpack.c.b16 %v358, %v357
    %v382 = vpack.c.b16 %v360, %v359
    %v383 = vpack.c.b16 %v362, %v361
    %v384 = vpack.c.b16 %v364, %v363
    %v385 = vpack.c.b16 %v366, %v365
    %v386 = vpack.c.b16 %v368, %v367
    %v387 = vpack.c.b16 %v370, %v369
    %v388 = vpack.c.b16 %v372, %v371
    %405 = vmatprep.subr.bf16.mxu0 0
    %406 = vmatpush1.bf16.msra.mxu0 %v373
    %407 = vmatprep.subr.bf16.mxu0 0
    %408 = vmatpush1.bf16.msra.mxu0 %v374
    %409 = vmatprep.subr.bf16.mxu0 0
    %410 = vmatpush1.bf16.msra.mxu0 %v375
    %411 = vmatprep.subr.bf16.mxu0 0
    %412 = vmatpush1.bf16.msra.mxu0 %v376
    %413 = vmatprep.subr.bf16.mxu0 0
    %414 = vmatpush1.bf16.msra.mxu0 %v377
    %415 = vmatprep.subr.bf16.mxu0 0
    %416 = vmatpush1.bf16.msra.mxu0 %v378
    %417 = vmatprep.subr.bf16.mxu0 0
    %418 = vmatpush1.bf16.msra.mxu0 %v379
    %419 = vmatprep.subr.bf16.mxu0 0
    %420 = vmatpush1.bf16.msra.mxu0 %v380
    %421 = vmatprep.subr.bf16.mxu0 0
    %422 = vmatpush1.bf16.msra.mxu0 %v381
    %423 = vmatprep.subr.bf16.mxu0 0
    %424 = vmatpush1.bf16.msra.mxu0 %v382
    %425 = vmatprep.subr.bf16.mxu0 0
    %426 = vmatpush1.bf16.msra.mxu0 %v383
    %427 = vmatprep.subr.bf16.mxu0 0
    %428 = vmatpush1.bf16.msra.mxu0 %v384
    %429 = vmatprep.subr.bf16.mxu0 0
    %430 = vmatpush1.bf16.msra.mxu0 %v385
    %431 = vmatprep.subr.bf16.mxu0 0
    %432 = vmatpush1.bf16.msra.mxu0 %v386
    %433 = vmatprep.subr.bf16.mxu0 0
    %434 = vmatpush1.bf16.msra.mxu0 %v387
    %435 = vmatprep.subr.bf16.mxu0 0
    %436 = vmatpush1.bf16.msra.mxu0 %v388
    %437 = vmatprep.mubr.bf16.mxu0 %v274
    %438 = vmatmul.mubr.bf16.gmra.mrb[0].mxu0 %v273
    %v439 = vpop.f32.mrb[0].mxu0
    %v440 = vadd.f32 %v308, %v439
    %v441 = vpop.f32.mrb[0].mxu0
    %v442 = vpop.f32.mrb[0].mxu0
    %v443 = vpop.f32.mrb[0].mxu0
    %444 = vdwg.mxu0
    %445 = vst [vmem:[#allocation9] sm:$0xff] %v440
    // Predicated region
    $region34: #{tpu_custom_call.1} parent=1 // pred_check
      _
    $region35: #{tpu_custom_call.1} parent=1 // pred_check_branch
      %447 = sbr.rel (0) target = $region37
    $region36: #{tpu_custom_call.1} parent=1 // pred_region
      %s449 = ssub.s32 128, 128
      %450 = vsyncadd [#allocation5], %s449
      %s452 = sshll.u32 [#allocation9], 4
      %s453 = int_to_ptr.vmem [resolvable:$true] %s452
      %455 = dma.vmem_to_hbm [thread:$0]  %s453, 128, %s5, [#allocation5]
    $region37: #{tpu_custom_call.1} parent=1 // pred_fallthru
      _
    // Predicated region
    $region38: #{tpu_custom_call.1} parent=1 // pred_check
      _
    $region39: #{tpu_custom_call.1} parent=1 // pred_check_branch
      %457 = sbr.rel (0) target = $region41
    $region40: #{tpu_custom_call.1} parent=1 // pred_region
      %458 = dma.done [#allocation5], 128
    $region41: #{tpu_custom_call.1} parent=1 // pred_fallthru
      _
    %459 = vsyncpa [#allocation4], 1
    %460 = vsyncpa [#allocation7], 1
    %461 = vsyncpa [#allocation5], 1

</llo_original>
